<compile_context>
chip_gen: v6e
topology: v6e:2x2x1
jax: 0.10.0
libtpu: 0.0.40
codegen_flags: <defaults>
</compile_context>

<pallas_src>
import functools

import jax
import jax.numpy as jnp
from jax import lax
from jax.experimental import pallas as pl
from jax.experimental.pallas import tpu as pltpu

_LANES = 128
_ACC_ROWS = 32          # 4 interleaved (8,128) accumulators -> 4x VALU ILP
                        # (also a multiple of the bf16/int8 sublane packing)


def _round_up(x, m):
    return ((x + m - 1) // m) * m


def _num_tensorcores():
    """Best-effort TensorCores per chip: 2 on v7x, 1 on v5e/v6e (safe default)."""
    try:
        kind = jax.devices()[0].device_kind.lower()
    except Exception:
        return 1
    return 2 if "v7" in kind else 1


def _vmem_capacity_bytes():
    try:
        return int(pltpu.get_tpu_info().vmem_capacity_bytes)
    except Exception:
        return 64 << 20          # conservative (v7x-sized) fallback


def _mse_partial_kernel(x_ref, t_ref, o_ref, acc_ref, *, rows, row_tile):
    """Accumulate sum((x-t)^2) for one partial; emit a single f32 per partial."""
    p = pl.program_id(0)
    i = pl.program_id(1)
    tiles_per_partial = pl.num_programs(1)

    @pl.when(i == 0)
    def _init():
        acc_ref[...] = jnp.zeros_like(acc_ref)

    d = x_ref[...].astype(jnp.float32) - t_ref[...].astype(jnp.float32)
    sq = d * d

    def _fold(v):
        # (row_tile, 128) -> (row_tile//32, 32, 128) sum over leading axis:
        # sublane-aligned reshape + vreg adds across 4 independent accumulators.
        return jnp.sum(v.reshape(-1, _ACC_ROWS, _LANES), axis=0)

    g = p * tiles_per_partial + i          # logical row-tile index
    row0 = g * row_tile

    # Hot path: tile fully in bounds -> completely mask-free.
    @pl.when(row0 + row_tile <= rows)
    def _full():
        acc_ref[...] += _fold(sq)

    # Ragged / over-range tile (at most one per partial): mask rows past the
    # array end BEFORE accumulating (Pallas pad region may hold garbage).
    @pl.when(row0 + row_tile > rows)
    def _ragged():
        rid = row0 + lax.broadcasted_iota(jnp.int32, (row_tile, _LANES), 0)
        acc_ref[...] += _fold(jnp.where(rid < rows, sq, 0.0))

    # Finish the cross-sublane + cross-lane reduction in-kernel (XLU is idle
    # here); write a single scalar per partial.
    @pl.when(i == tiles_per_partial - 1)
    def _flush():
        s = jnp.sum(acc_ref[...], axis=0, keepdims=True)      # (1, 128)
        o_ref[...] = jnp.sum(s, axis=1, keepdims=True)        # (1, 1)


def content_loss_forward(x, target):
    """ContentLoss.forward: returns (input passthrough, mse_loss scalar)."""
    assert x.shape == target.shape, "input / target shape mismatch"
    n = int(x.size)
    assert n > 0, "empty input"

    itemsize = jnp.dtype(x.dtype).itemsize
    num_partials = _num_tensorcores()
    vmem_cap = _vmem_capacity_bytes()

    # ---- lane-dense (rows, 128) view ---------------------------------------
    # Aligned shapes (numel % 128 == 0, rows >= 32) are zero-copy: reshape only.
    xf = x.reshape(-1)
    tf = target.reshape(-1)
    rows_logical = -(-n // _LANES)                 # ceil(n / 128)
    rows = max(rows_logical, _ACC_ROWS)            # >= one full 32-row tile
    padded_n = rows * _LANES
    if padded_n != n:
        # TODO(synk): sub-128 tails (numel % 128 != 0) and tiny inputs still
        # take one minimal zero-pad copy; all other raggedness is masked
        # in-kernel with no extra HBM traffic.
        xf = jnp.pad(xf, (0, padded_n - n))
        tf = jnp.pad(tf, (0, padded_n - n))
    x2 = xf.reshape(rows, _LANES)
    t2 = tf.reshape(rows, _LANES)

    # ---- tile / grid selection (dtype- and generation-aware) ---------------
    per_tile_bytes = 2 << 20                       # 2 MiB per input tile
    row_tile_cap = max(_ACC_ROWS,
                       (per_tile_bytes // (_LANES * itemsize)) // _ACC_ROWS * _ACC_ROWS)
    row_tile = min(row_tile_cap, _round_up(-(-rows // num_partials), _ACC_ROWS))
    row_tile = min(row_tile, (rows // _ACC_ROWS) * _ACC_ROWS)   # <= array rows
    row_tile = max(row_tile, _ACC_ROWS)

    tiles_total = -(-rows // row_tile)
    tiles_per_partial = -(-tiles_total // num_partials)
    grid = (num_partials, tiles_per_partial)

    tile_bytes = row_tile * _LANES * itemsize
    # 2 inputs x 2 pipeline buffers + generous headroom; capped vs physical VMEM.
    vmem_limit = int(min(max(4 * tile_bytes + (16 << 20), 24 << 20),
                         max(vmem_cap // 2, 24 << 20)))

    def in_map(p, i):
        # Clamp so no block origin lies past the array (extra tiles from an
        # uneven core split re-read the last block; the kernel masks their
        # logical contribution to zero).
        return (jnp.minimum(p * tiles_per_partial + i, tiles_total - 1), 0)

    in_spec = pl.BlockSpec((row_tile, _LANES), in_map)
    out_spec = pl.BlockSpec((None, 1, 1), lambda p, i: (p, 0, 0))

    if num_partials > 1:
        dim_sems = (pltpu.CORE_PARALLEL, pltpu.ARBITRARY)    # shard stream on v7x TCs
    else:
        dim_sems = ("arbitrary", "arbitrary")

    kernel = functools.partial(_mse_partial_kernel, rows=rows, row_tile=row_tile)

    cost = pl.CostEstimate(flops=3 * n, transcendentals=0,
                           bytes_accessed=2 * n * itemsize)

    partials = pl.pallas_call(
        kernel,
        out_shape=jax.ShapeDtypeStruct((num_partials, 1, 1), jnp.float32),
        grid_spec=pltpu.PrefetchScalarGridSpec(
            num_scalar_prefetch=0,
            grid=grid,
            in_specs=[in_spec, in_spec],
            out_specs=out_spec,
            scratch_shapes=[pltpu.VMEM((_ACC_ROWS, _LANES), jnp.float32)],
        ),
        compiler_params=pltpu.CompilerParams(
            dimension_semantics=dim_sems,
            vmem_limit_bytes=vmem_limit,
        ),
        cost_estimate=cost,
    )(x2, t2)

    # Tiny final combine over per-TensorCore scalars + divide by the TRUE n.
    loss = jnp.sum(partials) / jnp.float32(n)

    # ContentLoss.forward returns its input unchanged (loss is a side product).
    return x, loss


if __name__ == "__main__":
    key = jax.random.PRNGKey(0)
    k_x, k_t = jax.random.split(key)

    # Small NCHW shapes: batch=2, channels=4, spatial=16x16.
    x = jax.random.normal(k_x, (2, 4, 16, 16), dtype=jnp.float32)
    target = jax.random.normal(k_t, (2, 4, 16, 16), dtype=jnp.float32)

    out, loss = content_loss_forward(x, target)
    out = jax.block_until_ready(out)
    loss = jax.block_until_ready(loss)

    ref_loss = jnp.mean((x - target) ** 2)
    assert jnp.allclose(loss, ref_loss, rtol=1e-5, atol=1e-6), (loss, ref_loss)
    assert jnp.array_equal(out, x)

    # Non-aligned shape exercises the ragged / masking path (n % 128 != 0).
    k_x2, k_t2 = jax.random.split(jax.random.PRNGKey(1))
    x_odd = jax.random.normal(k_x2, (2, 3, 17, 19), dtype=jnp.float32)
    t_odd = jax.random.normal(k_t2, (2, 3, 17, 19), dtype=jnp.float32)
    _, loss_odd = content_loss_forward(x_odd, t_odd)
    loss_odd = jax.block_until_ready(loss_odd)
    ref_odd = jnp.mean((x_odd - t_odd) ** 2)
    assert jnp.allclose(loss_odd, ref_odd, rtol=1e-5, atol=1e-6), (loss_odd, ref_odd)

    # Larger 128-aligned shape: zero-copy path with multiple ragged-free tiles.
    k_x3, k_t3 = jax.random.split(jax.random.PRNGKey(2))
    x_big = jax.random.normal(k_x3, (2, 8, 40, 40), dtype=jnp.float32)
    t_big = jax.random.normal(k_t3, (2, 8, 40, 40), dtype=jnp.float32)
    _, loss_big = content_loss_forward(x_big, t_big)
    loss_big = jax.block_until_ready(loss_big)
    ref_big = jnp.mean((x_big - t_big) ** 2)
    assert jnp.allclose(loss_big, ref_big, rtol=1e-5, atol=1e-6), (loss_big, ref_big)

    print("KERNEL_OK")
</pallas_src>

<mosaic_0001>
module attributes {stable_mosaic.version = 11 : i64} {
  func.func @_mse_partial_kernel(%arg0: i32, %arg1: i32, %arg2: memref<32x128xf32, #tpu.memory_space<vmem>>, %arg3: memref<32x128xf32, #tpu.memory_space<vmem>>, %arg4: memref<1x1x1xf32, #tpu.memory_space<vmem>>, %arg5: memref<32x128xf32, #tpu.memory_space<vmem>>) attributes {dimension_semantics = [#tpu.dimension_semantics<arbitrary>, #tpu.dimension_semantics<arbitrary>], iteration_bounds = array<i64: 1, 1>, scalar_prefetch = 0 : i64, scratch_operands = 1 : i64, tpu.core_type = #tpu.core_type<tc>, window_params = [{transform_indices = @transform_0, window_bounds = array<i64: 32, 128>}, {transform_indices = @transform_1, window_bounds = array<i64: 32, 128>}, {transform_indices = @transform_2, window_bounds = array<i64: 1, 1, 1>}]} {
    %c0_i32 = arith.constant 0 : i32
    %0 = arith.cmpi eq, %arg1, %c0_i32 : i32
    %1 = arith.extui %0 : i1 to i32
    %c0_i32_0 = arith.constant 0 : i32
    %2 = arith.cmpi ne, %1, %c0_i32_0 : i32
    scf.if %2 {
      %cst = arith.constant 0.000000e+00 : f32
      %21 = vector.broadcast %cst : f32 to vector<32x128xf32>
      %c0_12 = arith.constant 0 : index
      %c0_13 = arith.constant 0 : index
      %22 = vector.load %arg5[%c0_12, %c0_13] : memref<32x128xf32, #tpu.memory_space<vmem>>, vector<32x128xf32>
      tpu.vector_store %arg5[%c0_12, %c0_13], %21 {strides = array<i32>} : memref<32x128xf32, #tpu.memory_space<vmem>>, vector<32x128xf32>,
    } else {
    }
    %c0 = arith.constant 0 : index
    %c0_1 = arith.constant 0 : index
    %3 = vector.load %arg2[%c0, %c0_1] : memref<32x128xf32, #tpu.memory_space<vmem>>, vector<32x128xf32>
    %c0_2 = arith.constant 0 : index
    %c0_3 = arith.constant 0 : index
    %4 = vector.load %arg3[%c0_2, %c0_3] : memref<32x128xf32, #tpu.memory_space<vmem>>, vector<32x128xf32>
    %5 = arith.subf %3, %4 : vector<32x128xf32>
    %6 = arith.mulf %5, %5 : vector<32x128xf32>
    %c1_i32 = arith.constant 1 : i32
    %7 = arith.muli %arg0, %c1_i32 : i32
    %8 = arith.addi %7, %arg1 : i32
    %c32_i32 = arith.constant 32 : i32
    %9 = arith.muli %8, %c32_i32 : i32
    %c32_i32_4 = arith.constant 32 : i32
    %10 = arith.addi %9, %c32_i32_4 : i32
    %c32_i32_5 = arith.constant 32 : i32
    %11 = arith.cmpi sle, %10, %c32_i32_5 : i32
    %12 = arith.extui %11 : i1 to i32
    %c0_i32_6 = arith.constant 0 : i32
    %13 = arith.cmpi ne, %12, %c0_i32_6 : i32
    scf.if %13 {
      %c0_12 = arith.constant 0 : index
      %c0_13 = arith.constant 0 : index
      %21 = vector.load %arg5[%c0_12, %c0_13] : memref<32x128xf32, #tpu.memory_space<vmem>>, vector<32x128xf32>
      %22 = vector.shape_cast %6 : vector<32x128xf32> to vector<1x32x128xf32>
      %cst = arith.constant dense<0.000000e+00> : vector<32x128xf32>
      %23 = vector.multi_reduction <add>, %22, %cst [0] : vector<1x32x128xf32> to vector<32x128xf32>
      %24 = arith.addf %21, %23 : vector<32x128xf32>
      %c0_14 = arith.constant 0 : index
      %c0_15 = arith.constant 0 : index
      %25 = vector.load %arg5[%c0_14, %c0_15] : memref<32x128xf32, #tpu.memory_space<vmem>>, vector<32x128xf32>
      tpu.vector_store %arg5[%c0_14, %c0_15], %24 {strides = array<i32>} : memref<32x128xf32, #tpu.memory_space<vmem>>, vector<32x128xf32>,
    } else {
    }
    %c32_i32_7 = arith.constant 32 : i32
    %14 = arith.addi %9, %c32_i32_7 : i32
    %c32_i32_8 = arith.constant 32 : i32
    %15 = arith.cmpi sgt, %14, %c32_i32_8 : i32
    %16 = arith.extui %15 : i1 to i32
    %c0_i32_9 = arith.constant 0 : i32
    %17 = arith.cmpi ne, %16, %c0_i32_9 : i32
    scf.if %17 {
      %21 = tpu.iota {dimensions = array<i32: 0>} : vector<32x128xi32>
      %22 = vector.broadcast %9 : i32 to vector<32x128xi32>
      %23 = arith.addi %22, %21 : vector<32x128xi32>
      %c0_12 = arith.constant 0 : index
      %c0_13 = arith.constant 0 : index
      %24 = vector.load %arg5[%c0_12, %c0_13] : memref<32x128xf32, #tpu.memory_space<vmem>>, vector<32x128xf32>
      %c32_i32_14 = arith.constant 32 : i32
      %25 = vector.broadcast %c32_i32_14 : i32 to vector<32x128xi32>
      %26 = arith.cmpi slt, %23, %25 : vector<32x128xi32>
      %cst = arith.constant 0.000000e+00 : f32
      %27 = vector.broadcast %cst : f32 to vector<32x128xf32>
      %28 = arith.select %26, %6, %27 : vector<32x128xi1>, vector<32x128xf32>
      %29 = vector.shape_cast %28 : vector<32x128xf32> to vector<1x32x128xf32>
      %cst_15 = arith.constant dense<0.000000e+00> : vector<32x128xf32>
      %30 = vector.multi_reduction <add>, %29, %cst_15 [0] : vector<1x32x128xf32> to vector<32x128xf32>
      %31 = arith.addf %24, %30 : vector<32x128xf32>
      %c0_16 = arith.constant 0 : index
      %c0_17 = arith.constant 0 : index
      %32 = vector.load %arg5[%c0_16, %c0_17] : memref<32x128xf32, #tpu.memory_space<vmem>>, vector<32x128xf32>
      tpu.vector_store %arg5[%c0_16, %c0_17], %31 {strides = array<i32>} : memref<32x128xf32, #tpu.memory_space<vmem>>, vector<32x128xf32>,
    } else {
    }
    %c0_i32_10 = arith.constant 0 : i32
    %18 = arith.cmpi eq, %arg1, %c0_i32_10 : i32
    %19 = arith.extui %18 : i1 to i32
    %c0_i32_11 = arith.constant 0 : i32
    %20 = arith.cmpi ne, %19, %c0_i32_11 : i32
    scf.if %20 {
      %c0_12 = arith.constant 0 : index
      %c0_13 = arith.constant 0 : index
      %21 = vector.load %arg5[%c0_12, %c0_13] : memref<32x128xf32, #tpu.memory_space<vmem>>, vector<32x128xf32>
      %cst = arith.constant dense<0.000000e+00> : vector<128xf32>
      %22 = vector.multi_reduction <add>, %21, %cst [0] : vector<32x128xf32> to vector<128xf32>
      %23 = vector.shape_cast %22 : vector<128xf32> to vector<1x128xf32>
      %cst_14 = arith.constant dense<0.000000e+00> : vector<1xf32>
      %24 = vector.multi_reduction <add>, %23, %cst_14 [1] : vector<1x128xf32> to vector<1xf32>
      %25 = vector.shape_cast %24 : vector<1xf32> to vector<1x1xf32>
      %c0_15 = arith.constant 0 : index
      %c0_16 = arith.constant 0 : index
      %c0_17 = arith.constant 0 : index
      %26 = vector.load %arg4[%c0_15, %c0_16, %c0_17] : memref<1x1x1xf32, #tpu.memory_space<vmem>>, vector<1x1x1xf32>
      %27 = vector.shape_cast %26 : vector<1x1x1xf32> to vector<1x1xf32>
      %28 = vector.shape_cast %25 : vector<1x1xf32> to vector<1x1x1xf32>
      tpu.vector_store %arg4[%c0_15, %c0_16, %c0_17], %28 {strides = array<i32>} : memref<1x1x1xf32, #tpu.memory_space<vmem>>, vector<1x1x1xf32>,
    } else {
    }
    return
  }
  func.func @transform_0(%arg0: i32, %arg1: i32) -> (i32, i32) {
    %c1_i32 = arith.constant 1 : i32
    %0 = arith.muli %arg0, %c1_i32 : i32
    %1 = arith.addi %0, %arg1 : i32
    %c0_i32 = arith.constant 0 : i32
    %2 = arith.minsi %1, %c0_i32 : i32
    %c0_i32_0 = arith.constant 0 : i32
    %c0_i32_1 = arith.constant 0 : i32
    return %2, %c0_i32_0 : i32, i32
  }
  func.func @transform_1(%arg0: i32, %arg1: i32) -> (i32, i32) {
    %c1_i32 = arith.constant 1 : i32
    %0 = arith.muli %arg0, %c1_i32 : i32
    %1 = arith.addi %0, %arg1 : i32
    %c0_i32 = arith.constant 0 : i32
    %2 = arith.minsi %1, %c0_i32 : i32
    %c0_i32_0 = arith.constant 0 : i32
    %c0_i32_1 = arith.constant 0 : i32
    return %2, %c0_i32_0 : i32, i32
  }
  func.func @transform_2(%arg0: i32, %arg1: i32) -> (i32, i32, i32) {
    %c0_i32 = arith.constant 0 : i32
    %c0_i32_0 = arith.constant 0 : i32
    %c0_i32_1 = arith.constant 0 : i32
    return %arg0, %c0_i32, %c0_i32_0 : i32, i32, i32
  }
}

</mosaic_0001>

<llo_original>
// kernel: tpu_custom_call.1
$region0: #{tpu_custom_call.1}
  #allocation0 [shape = 'u32[]', space=smem, size = 0x4, offset = 0x4, fixed_abs, tag = 'smem constant byte address 0x4 - core index']
  #allocation1 [shape = 'u32[144,128]{1,0:T(1,128)}', space=vmem, size = 0x12000, scoped, tag = 'internal scratch']
  #allocation2 [shape = 'f32[32,128]{1,0:T(8,128)}', space=vmem, size = 0x4000, scoped, tag = 'scratch operand']
  %s0 = inlined_call_operand.hbm [shape: f32[32,128], index: 0, kind: input, shape index: {}]
  %s1 = inlined_call_operand.hbm [shape: f32[32,128], index: 1, kind: input, shape index: {}]
  %s2 = inlined_call_operand.hbm [shape: f32[1,1,1], index: 2, kind: output, shape index: {}]
  %s3 = sld [smem:[#allocation0]]
  $region42: #{tpu_custom_call.1} parent=0
    _
  %s5 = ssub.s32 1, %s3
  %s6 = scalar_select 0, %s5, %s3
  $region1: #{tpu_custom_call.1} parent=0
    #allocation3 [shape = 'u8[16384]{0}', space=vmem, size = 0x4000, scoped, tag = 'input window, operand 0, single buffered']
    #allocation4 [shape = 's32[1]{0}', space=sflag, size = 0x4, scoped, tag = 'scoped memory for tpu_custom_call.1']
    #allocation5 [shape = 's32[1]{0}', space=sflag, size = 0x4, scoped, tag = 'scoped memory for tpu_custom_call.1']
    #allocation6 [shape = 'u8[16384]{0}', space=vmem, size = 0x4000, scoped, tag = 'input window, operand 1, single buffered']
    #allocation7 [shape = 's32[1]{0}', space=sflag, size = 0x4, scoped, tag = 'scoped memory for tpu_custom_call.1']
    #allocation8 [shape = 'u8[512]{0}', space=vmem, size = 0x400, scoped, tag = 'output window, operand 0, single buffered']
    %7 = vsyncpa [#allocation4], 0
    %8 = vsyncpa [#allocation7], 0
    %9 = vsyncpa [#allocation5], 0
    // Predicated region
    $region2: #{tpu_custom_call.1} parent=1 // pred_check
      _
    $region3: #{tpu_custom_call.1} parent=1 // pred_check_branch
      %11 = sbr.rel (0) target = $region5
    $region4: #{tpu_custom_call.1} parent=1 // pred_region
      %s12 = sadd.s32 0, 0
      %p13 = scmp.lt.s32.totalorder %s12, 0
      %s14 = scalar_select %p13, %s12, 0
      %s15 = smul.u32 4, %s14
      %s17 = ssub.s32 512, 512
      %18 = vsyncadd [#allocation4], %s17
      %s19 = smul.addr %s15, 128
      %s20 = scalar_lea.hbm %s0, %s19
      %s21 = sshll.u32 [#allocation3], 4
      %s22 = int_to_ptr.vmem [resolvable:$true] %s21
      %27 = dma.hbm_to_vmem [thread:$0]  %s20, 512, %s22, [#allocation4], 128, 128, 8
    $region5: #{tpu_custom_call.1} parent=1 // pred_fallthru
      _
    // Predicated region
    $region6: #{tpu_custom_call.1} parent=1 // pred_check
      _
    $region7: #{tpu_custom_call.1} parent=1 // pred_check_branch
      %29 = sbr.rel (0) target = $region9
    $region8: #{tpu_custom_call.1} parent=1 // pred_region
      %s30 = sadd.s32 0, 0
      %p31 = scmp.lt.s32.totalorder %s30, 0
      %s32 = scalar_select %p31, %s30, 0
      %s33 = smul.u32 4, %s32
      %s35 = ssub.s32 512, 512
      %36 = vsyncadd [#allocation7], %s35
      %s37 = smul.addr %s33, 128
      %s38 = scalar_lea.hbm %s1, %s37
      %s39 = sshll.u32 [#allocation6], 4
      %s40 = int_to_ptr.vmem [resolvable:$true] %s39
      %45 = dma.hbm_to_vmem [thread:$0]  %s38, 512, %s40, [#allocation7], 128, 128, 8
    $region9: #{tpu_custom_call.1} parent=1 // pred_fallthru
      _
    // Predicated region
    $region10: #{tpu_custom_call.1} parent=1 // pred_check
      _
    $region11: #{tpu_custom_call.1} parent=1 // pred_check_branch
      %47 = sbr.rel (0) target = $region13
    $region12: #{tpu_custom_call.1} parent=1 // pred_region
      %48 = dma.done [#allocation4], 512
    $region13: #{tpu_custom_call.1} parent=1 // pred_fallthru
      _
    // Predicated region
    $region14: #{tpu_custom_call.1} parent=1 // pred_check
      _
    $region15: #{tpu_custom_call.1} parent=1 // pred_check_branch
      %50 = sbr.rel (0) target = $region17
    $region16: #{tpu_custom_call.1} parent=1 // pred_region
      %51 = dma.done [#allocation7], 512
    $region17: #{tpu_custom_call.1} parent=1 // pred_fallthru
      _
    %s52 = sadd.s32 0, 0
    %p53 = scmp.lt.s32.totalorder %s52, 0
    %s54 = scalar_select %p53, %s52, 0
    %s55 = smul.u32 4, %s54
    %s56 = sadd.s32 0, 0
    %p57 = scmp.lt.s32.totalorder %s56, 0
    %s58 = scalar_select %p57, %s56, 0
    %s59 = smul.u32 4, %s58
    %p60 = scmp.eq.s32.totalorder 0, 0
    // Predicated region
    $region18: #{tpu_custom_call.1} parent=1 // pred_check
      %p61 = pneg %p60
    $region19: #{tpu_custom_call.1} parent=1 // pred_check_branch
      %63 = sbr.rel (%p61) target = $region21
    $region20: #{tpu_custom_call.1} parent=1 // pred_region
      %64 = vst [vmem:[#allocation2] sm:$0xff] 0.0
      %65 = vst [vmem:[#allocation2 + $0x8] sm:$0xff] 0.0
      %66 = vst [vmem:[#allocation2 + $0x10] sm:$0xff] 0.0
      %67 = vst [vmem:[#allocation2 + $0x18] sm:$0xff] 0.0
    $region21: #{tpu_custom_call.1} parent=1 // pred_fallthru
      _
    %v68 = vld [vmem:[#allocation3] sm:$0xff]
    %v69 = vld [vmem:[#allocation3 + $0x8] sm:$0xff]
    %v70 = vld [vmem:[#allocation3 + $0x10] sm:$0xff]
    %v71 = vld [vmem:[#allocation3 + $0x18] sm:$0xff]
    %v72 = vld [vmem:[#allocation6] sm:$0xff]
    %v73 = vld [vmem:[#allocation6 + $0x8] sm:$0xff]
    %v74 = vld [vmem:[#allocation6 + $0x10] sm:$0xff]
    %v75 = vld [vmem:[#allocation6 + $0x18] sm:$0xff]
    %v76 = vsub.f32 %v68, %v72
    %v77 = vsub.f32 %v69, %v73
    %v78 = vsub.f32 %v70, %v74
    %v79 = vsub.f32 %v71, %v75
    %v80 = vmul.f32 %v76, %v76
    %v81 = vmul.f32 %v77, %v77
    %v82 = vmul.f32 %v78, %v78
    %v83 = vmul.f32 %v79, %v79
    %s84 = sadd.s32 0, 0
    %s85 = smul.u32 %s84, 32
    %s86 = sadd.s32 %s85, 32
    %p87 = scmp.le.s32.totalorder %s86, 32
    // Predicated region
    $region22: #{tpu_custom_call.1} parent=1 // pred_check
      %p88 = pneg %p87
    $region23: #{tpu_custom_call.1} parent=1 // pred_check_branch
      %90 = sbr.rel (%p88) target = $region25
    $region24: #{tpu_custom_call.1} parent=1 // pred_region
      %v91 = vld [vmem:[#allocation2] sm:$0xff]
      %v92 = vld [vmem:[#allocation2 + $0x8] sm:$0xff]
      %v93 = vld [vmem:[#allocation2 + $0x10] sm:$0xff]
      %v94 = vld [vmem:[#allocation2 + $0x18] sm:$0xff]
      %v95 = vadd.f32 %v80, 0.0
      %v96 = vadd.f32 %v81, 0.0
      %v97 = vadd.f32 %v82, 0.0
      %v98 = vadd.f32 %v83, 0.0
      %v99 = vadd.f32 %v91, %v95
      %v100 = vadd.f32 %v92, %v96
      %v101 = vadd.f32 %v93, %v97
      %v102 = vadd.f32 %v94, %v98
      %103 = vst [vmem:[#allocation2] sm:$0xff] %v99
      %104 = vst [vmem:[#allocation2 + $0x8] sm:$0xff] %v100
      %105 = vst [vmem:[#allocation2 + $0x10] sm:$0xff] %v101
      %106 = vst [vmem:[#allocation2 + $0x18] sm:$0xff] %v102
    $region25: #{tpu_custom_call.1} parent=1 // pred_fallthru
      _
    %p107 = scmp.gt.s32.totalorder %s86, 32
    // Predicated region
    $region26: #{tpu_custom_call.1} parent=1 // pred_check
      %p108 = pneg %p107
    $region27: #{tpu_custom_call.1} parent=1 // pred_check_branch
      %110 = sbr.rel (%p108) target = $region29
    $region28: #{tpu_custom_call.1} parent=1 // pred_region
      %v111 = vlaneseq
      %v112 = vshrl.u32 %v111, 7
      %v113 = vadd.s32 %v112, 8
      %v114 = vadd.s32 %v112, 16
      %v115 = vadd.s32 %v112, 24
      %v116 = vstv %s85
      %v117 = vadd.s32 %v116, %v112
      %v118 = vadd.s32 %v116, %v113
      %v119 = vadd.s32 %v116, %v114
      %v120 = vadd.s32 %v116, %v115
      %v121 = vld [vmem:[#allocation2] sm:$0xff]
      %v122 = vld [vmem:[#allocation2 + $0x8] sm:$0xff]
      %v123 = vld [vmem:[#allocation2 + $0x10] sm:$0xff]
      %v124 = vld [vmem:[#allocation2 + $0x18] sm:$0xff]
      %vm125 = vcmp.lt.s32.totalorder %v117, 32
      %vm126 = vcmp.lt.s32.totalorder %v118, 32
      %vm127 = vcmp.lt.s32.totalorder %v119, 32
      %vm128 = vcmp.lt.s32.totalorder %v120, 32
      %v129 = vsel %vm125, %v80, 0.0
      %v130 = vsel %vm126, %v81, 0.0
      %v131 = vsel %vm127, %v82, 0.0
      %v132 = vsel %vm128, %v83, 0.0
      %v133 = vadd.f32 %v129, 0.0
      %v134 = vadd.f32 %v130, 0.0
      %v135 = vadd.f32 %v131, 0.0
      %v136 = vadd.f32 %v132, 0.0
      %v137 = vadd.f32 %v121, %v133
      %v138 = vadd.f32 %v122, %v134
      %v139 = vadd.f32 %v123, %v135
      %v140 = vadd.f32 %v124, %v136
      %141 = vst [vmem:[#allocation2] sm:$0xff] %v137
      %142 = vst [vmem:[#allocation2 + $0x8] sm:$0xff] %v138
      %143 = vst [vmem:[#allocation2 + $0x10] sm:$0xff] %v139
      %144 = vst [vmem:[#allocation2 + $0x18] sm:$0xff] %v140
    $region29: #{tpu_custom_call.1} parent=1 // pred_fallthru
      _
    // Predicated region
    $region30: #{tpu_custom_call.1} parent=1 // pred_check
      %p145 = pneg %p60
    $region31: #{tpu_custom_call.1} parent=1 // pred_check_branch
      %147 = sbr.rel (%p145) target = $region33
    $region32: #{tpu_custom_call.1} parent=1 // pred_region
      %v148 = vld [vmem:[#allocation2] sm:$0xff]
      %v149 = vld [vmem:[#allocation2 + $0x8] sm:$0xff]
      %v150 = vld [vmem:[#allocation2 + $0x10] sm:$0xff]
      %v151 = vld [vmem:[#allocation2 + $0x18] sm:$0xff]
      %v152 = vadd.f32 %v148, %v149
      %v153 = vadd.f32 %v152, %v150
      %v154 = vadd.f32 %v153, %v151
      %v155 = vrot.slane %v154, 4
      %v156 = vadd.f32 %v154, %v155
      %v157 = vrot.slane %v156, 2
      %v158 = vadd.f32 %v156, %v157
      %v159 = vrot.slane %v158, 1
      %v160 = vadd.f32 %v158, %v159
      %161 = vadd.xlane.f32.xlu0 %v160
      %v162 = vpop.xlane.xlu0 %161
      %vm163 = vcmask 0
      %164 = vst.msk [vmem:[#allocation8] sm:$0x1] %vm163, %v162
    $region33: #{tpu_custom_call.1} parent=1 // pred_fallthru
      _
    // Predicated region
    $region34: #{tpu_custom_call.1} parent=1 // pred_check
      _
    $region35: #{tpu_custom_call.1} parent=1 // pred_check_branch
      %166 = sbr.rel (0) target = $region37
    $region36: #{tpu_custom_call.1} parent=1 // pred_region
      %s168 = ssub.s32 16, 16
      %169 = vsyncadd [#allocation5], %s168
      %s171 = sshll.u32 [#allocation8], 4
      %s172 = int_to_ptr.vmem [resolvable:$true] %s171
      %174 = dma.vmem_to_hbm [thread:$0]  %s172, 16, %s2, [#allocation5]
    $region37: #{tpu_custom_call.1} parent=1 // pred_fallthru
      _
    // Predicated region
    $region38: #{tpu_custom_call.1} parent=1 // pred_check
      _
    $region39: #{tpu_custom_call.1} parent=1 // pred_check_branch
      %176 = sbr.rel (0) target = $region41
    $region40: #{tpu_custom_call.1} parent=1 // pred_region
      %177 = dma.done [#allocation5], 16
    $region41: #{tpu_custom_call.1} parent=1 // pred_fallthru
      _
    %178 = vsyncpa [#allocation4], 1
    %179 = vsyncpa [#allocation7], 1
    %180 = vsyncpa [#allocation5], 1

</llo_original>
